<compile_context>
chip_gen: v7x
topology: tpu7x:2x2x1
jax: 0.10.0
libtpu: 0.0.40
codegen_flags: <defaults>
</compile_context>

<pallas_src>
import functools
import math

import jax
import jax.numpy as jnp
from jax.experimental import pallas as pl
from jax.experimental.pallas import tpu as pltpu

# Matmul operand dtype (MXU native); accumulation stays fp32, LayerNorm / elementwise
# math stays fp32 (v5e has no bf16 VPU/EUP).
MXU_DTYPE = jnp.bfloat16
_LN_EPS = 1e-5
_NORM_EPS = 1e-5

_PARALLEL_1D = pltpu.CompilerParams(dimension_semantics=("parallel",))


def _round_up(x, m):
    return (x + m - 1) // m * m


def _tile_rows(r, max_tile=256):
    """Row-tile size (multiple of 8 sublanes, <= max_tile) and padded row count."""
    r8 = _round_up(max(r, 1), 8)
    tm = min(max_tile, r8)
    return tm, _round_up(r8, tm)


# ----------------------------------------------------------------------------
# Pallas kernels
# ----------------------------------------------------------------------------

def _proj2_kernel(x_ref, g1_ref, be1_ref, w1_ref, b1_ref,
                  g2_ref, be2_ref, w2_ref, b2_ref, o_ref,
                  *, relu1, relu2, l2norm_first):
    """Fused input-projection stack (eval, n_input_proj=2):
         [optional per-row L2-normalize (fused post_process_text)]
         -> LN -> Linear -> (ReLU) -> LN -> Linear -> (ReLU).
    Intermediate activations stay in registers/VMEM (no HBM round-trip)."""
    x = x_ref[...].astype(jnp.float32)                              # (TM, Din)
    if l2norm_first:
        # F.normalize(x, -1, eps): x / max(||x||,eps) == x * rsqrt(max(ss, eps^2)) (EUP)
        ss = jnp.sum(x * x, axis=-1, keepdims=True)
        x = x * jax.lax.rsqrt(jnp.maximum(ss, _NORM_EPS * _NORM_EPS))
    mu = jnp.mean(x, axis=-1, keepdims=True)
    var = jnp.mean(jnp.square(x - mu), axis=-1, keepdims=True)
    xn = (x - mu) * jax.lax.rsqrt(var + _LN_EPS) * g1_ref[...] + be1_ref[...]
    h = jnp.dot(xn.astype(MXU_DTYPE), w1_ref[...],
                preferred_element_type=jnp.float32) + b1_ref[...]
    if relu1:
        h = jnp.maximum(h, 0.0)
    mu2 = jnp.mean(h, axis=-1, keepdims=True)
    var2 = jnp.mean(jnp.square(h - mu2), axis=-1, keepdims=True)
    hn = (h - mu2) * jax.lax.rsqrt(var2 + _LN_EPS) * g2_ref[...] + be2_ref[...]
    y = jnp.dot(hn.astype(MXU_DTYPE), w2_ref[...],
                preferred_element_type=jnp.float32) + b2_ref[...]
    if relu2:
        y = jnp.maximum(y, 0.0)
    o_ref[...] = y.astype(o_ref.dtype)


def _heads_kernel(x_ref, wcomb_ref, bcomb_ref, w2_ref, b2_ref, w3_ref, b3_ref,
                  o_ref, *, h_dim):
    """Fused decoder heads over the same bf16 hs rows.
    First matmul uses the concatenated [span_w1 | class_w(padded to 64)] operand, so x is
    pushed through the MXU once for both heads; output is one 128-wide lane-dense slab."""
    x = x_ref[...]                                                  # (TM, D) bf16
    z = jnp.dot(x, wcomb_ref[...],
                preferred_element_type=jnp.float32) + bcomb_ref[...]  # (TM, H+64)
    h = jnp.maximum(z[:, :h_dim], 0.0)                              # span MLP layer 1
    cls = z[:, h_dim:]                                              # class logits (padded)
    h = jnp.maximum(jnp.dot(h.astype(MXU_DTYPE), w2_ref[...],
                            preferred_element_type=jnp.float32) + b2_ref[...], 0.0)
    sp = jnp.dot(h.astype(MXU_DTYPE), w3_ref[...],
                 preferred_element_type=jnp.float32) + b3_ref[...]
    o_ref[...] = jnp.concatenate([cls, sp], axis=-1).astype(o_ref.dtype)


def _saliency_kernel(mem_ref, u_ref, c_ref, o_ref):
    """Per-batch saliency matvec (positive and negative batches stacked along the grid):
       scores_row = u[b] . memory[b].T + c[b]  -> (1, Lv_pad) lane-dense store.
    (proj2 / W1-fold / bias / 1/sqrt(D) precomputed per batch in the wrapper.)"""
    i = pl.program_id(0)
    m = mem_ref[0]                                                  # (Lv_pad, D) bf16
    u = u_ref[...]                                                  # (1, D) bf16
    s = jax.lax.dot_general(u, m, (((1,), (1,)), ((), ())),
                            preferred_element_type=jnp.float32)     # (1, Lv_pad)
    o_ref[...] = (s + c_ref[i]).astype(o_ref.dtype)                 # c: SMEM scalar


# ----------------------------------------------------------------------------
# Pallas wrappers
# ----------------------------------------------------------------------------

def input_proj(x, layers, l2norm_first=False, max_tile=256):
    """Fused LinearLayer stack (n_input_proj=2), rows flattened to (N*L, Din), row-tiled.
    With l2norm_first=True the text post-process L2 normalization is fused in."""
    assert len(layers) == 2, "fused kernel implements the default n_input_proj=2 stack"
    p1, p2 = layers
    N, L, Din = x.shape
    H = p1["w"].shape[1]
    Dout = p2["w"].shape[1]
    R = N * L
    TM, R_pad = _tile_rows(R, max_tile)
    x2 = x.reshape(R, Din)
    if R_pad != R:
        x2 = jnp.pad(x2, ((0, R_pad - R), (0, 0)))
    kern = functools.partial(_proj2_kernel, relu1=p1["relu"], relu2=p2["relu"],
                             l2norm_first=l2norm_first)
    out = pl.pallas_call(
        kern,
        out_shape=jax.ShapeDtypeStruct((R_pad, Dout), jnp.float32),
        grid=(R_pad // TM,),
        in_specs=[pl.BlockSpec((TM, Din), lambda i: (i, 0)),
                  pl.BlockSpec((1, Din), lambda i: (0, 0)),     # gamma1
                  pl.BlockSpec((1, Din), lambda i: (0, 0)),     # beta1
                  pl.BlockSpec((Din, H), lambda i: (0, 0)),     # w1 (bf16)
                  pl.BlockSpec((1, H), lambda i: (0, 0)),       # b1
                  pl.BlockSpec((1, H), lambda i: (0, 0)),       # gamma2
                  pl.BlockSpec((1, H), lambda i: (0, 0)),       # beta2
                  pl.BlockSpec((H, Dout), lambda i: (0, 0)),    # w2 (bf16)
                  pl.BlockSpec((1, Dout), lambda i: (0, 0))],   # b2
        out_specs=pl.BlockSpec((TM, Dout), lambda i: (i, 0)),
        compiler_params=_PARALLEL_1D,
    )(x2, p1["gamma"], p1["beta"], p1["w"].astype(MXU_DTYPE), p1["b"],
      p2["gamma"], p2["beta"], p2["w"].astype(MXU_DTYPE), p2["b"])
    return out[:R].reshape(N, L, Dout)


_HEAD_PAD = 64  # class logits live in lanes [0:2], raw span output in lanes [64:66]


def decoder_heads(hs, class_p, span_p, max_tile=256):
    """Fused class_embed + span_embed(MLP,3) over all (dec_layer, batch, query) rows."""
    n_dec, N, nq, D = hs.shape
    R = n_dec * N * nq
    H = span_p["w1"].shape[1]
    TM, R_pad = _tile_rows(R, max_tile)
    # bf16 rows in the wrapper: kernel casts to MXU_DTYPE anyway, halves the HBM read.
    x2 = hs.reshape(R, D).astype(MXU_DTYPE)
    if R_pad != R:
        x2 = jnp.pad(x2, ((0, R_pad - R), (0, 0)))

    def padw(w):  # (K, 2) -> (K, _HEAD_PAD), bf16 for the MXU
        return jnp.pad(w, ((0, 0), (0, _HEAD_PAD - w.shape[1]))).astype(MXU_DTYPE)

    def padb(b):  # (1, 2) -> (1, _HEAD_PAD)
        return jnp.pad(b, ((0, 0), (0, _HEAD_PAD - b.shape[1])))

    # One combined first-layer operand: [span_w1 | class_w_padded]  -> single MXU pass on x.
    w_comb = jnp.concatenate([span_p["w1"].astype(MXU_DTYPE), padw(class_p["w"])], axis=1)
    b_comb = jnp.concatenate([span_p["b1"], padb(class_p["b"])], axis=1)

    kern = functools.partial(_heads_kernel, h_dim=H)
    out = pl.pallas_call(
        kern,
        out_shape=jax.ShapeDtypeStruct((R_pad, 2 * _HEAD_PAD), jnp.float32),
        grid=(R_pad // TM,),
        in_specs=[pl.BlockSpec((TM, D), lambda i: (i, 0)),
                  pl.BlockSpec((D, H + _HEAD_PAD), lambda i: (0, 0)),  # [w1 | wc_pad]
                  pl.BlockSpec((1, H + _HEAD_PAD), lambda i: (0, 0)),  # [b1 | bc_pad]
                  pl.BlockSpec((H, H), lambda i: (0, 0)),              # span w2
                  pl.BlockSpec((1, H), lambda i: (0, 0)),
                  pl.BlockSpec((H, _HEAD_PAD), lambda i: (0, 0)),      # span w3 (padded)
                  pl.BlockSpec((1, _HEAD_PAD), lambda i: (0, 0))],
        out_specs=pl.BlockSpec((TM, 2 * _HEAD_PAD), lambda i: (i, 0)),
        compiler_params=_PARALLEL_1D,
    )(x2, w_comb, b_comb,
      span_p["w2"].astype(MXU_DTYPE), span_p["b2"],
      padw(span_p["w3"]), padb(span_p["b3"]))

    n_cls = class_p["w"].shape[1]
    n_span = span_p["w3"].shape[1]
    outputs_class = out[:R, H:H + n_cls].reshape(0, 0, 0, 0) if False else None  # (unused)
    outputs_class = out[:R, :n_cls].reshape(n_dec, N, nq, n_cls)
    span_raw = out[:R, _HEAD_PAD:_HEAD_PAD + n_span].reshape(n_dec, N, nq, n_span)
    return outputs_class, span_raw


def saliency_scores_pair(memory, neg_memory, memory_global, neg_memory_global,
                         p1, p2, hidden_dim):
    """sum(proj1(mem) * proj2(mem_global)[:,None,:], -1) / sqrt(D), rewritten as
       v = mg @ W2 + b2 ;  score = memory @ (scale * W1^T v) + scale * (b1 . v)   (per batch).
    Positive and negative batches are stacked and handled by ONE pallas_call (grid=(2N,))."""
    N, Lv, D = memory.shape
    scale = 1.0 / math.sqrt(hidden_dim)
    mem = jnp.concatenate([memory, neg_memory], axis=0)            # (2N, Lv, D)
    mg = jnp.concatenate([memory_global, neg_memory_global], axis=0)  # (2N, D)
    # Tiny (2N,D)x(D,D) projections hoisted out of the per-batch grid (plain XLA, fp32).
    v = mg @ p2["w"] + p2["b"]                                     # (2N, D)
    u = (v @ p1["w"].T) * scale                                    # (2N, D)
    c = jnp.sum(v * p1["b"], axis=-1) * scale                      # (2N,)  folded in-kernel
    lv_pad = _round_up(Lv, 128)                                    # lane-dense output slab
    mem_b = mem.astype(MXU_DTYPE)                                  # kernel casts anyway
    if lv_pad != Lv:
        mem_b = jnp.pad(mem_b, ((0, 0), (0, lv_pad - Lv), (0, 0)))
    out = pl.pallas_call(
        _saliency_kernel,
        out_shape=jax.ShapeDtypeStruct((2 * N, lv_pad), jnp.float32),
        grid=(2 * N,),
        in_specs=[pl.BlockSpec((1, lv_pad, D), lambda i: (i, 0, 0)),
                  pl.BlockSpec((1, D), lambda i: (i, 0)),
                  pl.BlockSpec(memory_space=pltpu.MemorySpace.SMEM)],  # c (2N,) scalars
        out_specs=pl.BlockSpec((1, lv_pad), lambda i: (i, 0)),
        compiler_params=_PARALLEL_1D,
    )(mem_b, u.astype(MXU_DTYPE), c.astype(jnp.float32))
    return out[:N, :Lv], out[N:, :Lv]


# ----------------------------------------------------------------------------
# Plain-JAX glue
# ----------------------------------------------------------------------------

def text_mask_and_sentence(words_feat_raw):
    """words_mask and sentence_feat of post_process_text, in plain XLA (cheap reductions).
    The per-word L2-normalization itself is fused into the text input_proj kernel."""
    mask = jnp.any(words_feat_raw != 0.0, axis=-1)                 # (N, Lw) bool
    ss = jnp.sum(words_feat_raw * words_feat_raw, axis=-1, keepdims=True)
    xn = words_feat_raw * jax.lax.rsqrt(jnp.maximum(ss, _NORM_EPS * _NORM_EPS))
    cnt = jnp.maximum(jnp.sum(mask.astype(jnp.float32), axis=1, keepdims=True), 1.0)
    sent = jnp.sum(xn, axis=1) / cnt                               # (N, D)
    s2 = jnp.sum(sent * sent, axis=-1, keepdims=True)
    sent = sent * jax.lax.rsqrt(jnp.maximum(s2, _NORM_EPS * _NORM_EPS))
    return mask, sent


def inverse_sigmoid(x, eps=1e-3):
    x = jnp.clip(x, 0.0, 1.0)
    x1 = jnp.clip(x, eps, None)
    x2 = jnp.clip(1.0 - x, eps, None)
    return jnp.log(x1 / x2)


def sine_position_embed(mask, d_model):
    # TODO(synk): `vid_position_embed` module is external to the reference file;
    # a standard 1-D normalized sine embedding is used as a deterministic stand-in.
    pos = jnp.cumsum(mask.astype(jnp.float32), axis=1)
    pos = pos / (pos[:, -1:] + 1e-6) * 2.0 * math.pi
    dim_t = jnp.arange(d_model, dtype=jnp.float32)
    dim_t = 10000.0 ** (2.0 * jnp.floor(dim_t / 2.0) / d_model)
    ang = pos[:, :, None] / dim_t
    return jnp.where(jnp.arange(d_model) % 2 == 0, jnp.sin(ang), jnp.cos(ang))


def transformer_standin(params, src, valid_mask, query_embed, global_token):
    # TODO(synk): external `transformer` (DETR-style enc/dec) not provided in the reference
    # file; deterministic stand-in producing correctly-shaped (hs, reference, memory, memory_global).
    N, Lv, D = src.shape
    nq = query_embed.shape[0]
    n_dec = 2
    memory = src                                                   # (N, Lv, D)
    m = valid_mask[..., None].astype(jnp.float32)
    memory_global = (jnp.sum(memory * m, axis=1)
                     / jnp.maximum(jnp.sum(m, axis=1), 1.0)) + global_token   # (N, D)
    q = jnp.tanh(query_embed @ params["q_proj"])                   # (nq, D)
    hs = jnp.broadcast_to(q[None, None], (n_dec, N, nq, D)) + memory_global[None, :, None, :]
    reference = jnp.broadcast_to(jax.nn.sigmoid(query_embed)[None], (N, nq, 2))
    return hs, reference, memory, memory_global


# ----------------------------------------------------------------------------
# Parameter construction (deterministic, synthetic)
# ----------------------------------------------------------------------------

def _init_linear(key, din, dout):
    k1, k2 = jax.random.split(key)
    bound = 1.0 / math.sqrt(din)
    return {"w": jax.random.uniform(k1, (din, dout), jnp.float32, -bound, bound),
            "b": jax.random.uniform(k2, (1, dout), jnp.float32, -bound, bound)}


def _init_linear_layer(key, din, dout, relu):
    p = _init_linear(key, din, dout)
    p["gamma"] = jnp.ones((1, din), jnp.float32)
    p["beta"] = jnp.zeros((1, din), jnp.float32)
    p["relu"] = relu
    return p


def _init_mlp3(key, din, hidden, dout):
    k1, k2, k3 = jax.random.split(key, 3)
    l1 = _init_linear(k1, din, hidden)
    l2 = _init_linear(k2, hidden, hidden)
    l3 = _init_linear(k3, hidden, dout)
    return {"w1": l1["w"], "b1": l1["b"],
            "w2": l2["w"], "b2": l2["b"],
            "w3": l3["w"], "b3": l3["b"]}


def build_mesm_params(key, txt_dim, vid_dim, hidden_dim, num_queries, n_input_proj=2):
    keys = jax.random.split(key, 16)
    relu_args = [True, True, True]
    relu_args[n_input_proj - 1] = False
    txt_dims = [txt_dim, hidden_dim, hidden_dim]
    vid_dims = [vid_dim, hidden_dim, hidden_dim]
    params = {
        "input_txt_proj": [
            _init_linear_layer(keys[i], txt_dims[i], hidden_dim, relu_args[i])
            for i in range(n_input_proj)],
        "input_vid_proj": [
            _init_linear_layer(keys[4 + i], vid_dims[i], hidden_dim, relu_args[i])
            for i in range(n_input_proj)],
        "span_embed": _init_mlp3(keys[8], hidden_dim, hidden_dim, 2),
        "class_embed": _init_linear(keys[11], hidden_dim, 2),
        "saliency_proj1": _init_linear(keys[12], hidden_dim, hidden_dim),
        "saliency_proj2": _init_linear(keys[13], hidden_dim, hidden_dim),
        "query_embed": jax.random.normal(keys[14], (num_queries, 2), jnp.float32),
        "global_rep_token": jax.random.normal(keys[15], (hidden_dim,), jnp.float32),
        "transformer": {"q_proj": jax.random.normal(keys[3], (2, hidden_dim), jnp.float32) * 0.1},
        "hidden_dim": hidden_dim,
    }
    return params


# ----------------------------------------------------------------------------
# MESM forward (text_encoder=None, rec_fw=False, rec_ss=False, use_txt_pos=False,
#               aux_loss=False, span_loss_type='l1', eval mode, normalize_txt=True)
# ----------------------------------------------------------------------------

def mesm_forward(params, video_feat, video_mask, words_feat_in, num_clips):
    hidden_dim = params["hidden_dim"]

    # text path (text_encoder is None -> post_process_text):
    # mask + sentence pooling in plain XLA; the per-word L2-normalize is fused into the
    # text input_proj kernel below (no HBM round trip of the normalized words tensor).
    words_mask, sentence_feat = text_mask_and_sentence(words_feat_in)

    # TODO(synk): `spatial_attention` is an external module (not in the reference file); identity used.
    video_feat = video_feat

    # input projections — fused (L2-norm)+LN+Linear(+ReLU)+LN+Linear Pallas kernels
    projed_video_feat = input_proj(video_feat, params["input_vid_proj"])
    projed_words_feat = input_proj(words_feat_in, params["input_txt_proj"], l2norm_first=True)

    vid_position = sine_position_embed(video_mask, hidden_dim)
    del sentence_feat, vid_position  # only consumed by external encoders (stand-ins)

    # rec_fw=False -> enhanced = projed; rec_ss=False -> expanded = projed words
    enhanced_video_feat = projed_video_feat
    expanded_words_feat = projed_words_feat
    expanded_words_mask = words_mask

    # TODO(synk): `t2v_encoder` is an external module (not in the reference file); identity used.
    encoded_video_feat = enhanced_video_feat

    batch_size = video_feat.shape[0]
    global_token = jnp.broadcast_to(params["global_rep_token"][None, :],
                                    (batch_size, hidden_dim))

    hs, reference, memory, memory_global = transformer_standin(
        params["transformer"], encoded_video_feat, video_mask,
        params["query_embed"], global_token)

    # decoder heads — single fused Pallas kernel (one MXU pass on hs for both heads)
    outputs_class, span_raw = decoder_heads(hs, params["class_embed"], params["span_embed"])
    outputs_coord = jax.nn.sigmoid(span_raw + inverse_sigmoid(reference)[None])

    # negative branch
    # TODO(synk): `sample_outclass_neg` utility not provided; deterministic roll-by-1 used.
    neg_index = jnp.roll(jnp.arange(batch_size), 1)
    neg_expanded_words_feat = expanded_words_feat[neg_index]
    neg_expanded_words_mask = expanded_words_mask[neg_index]
    del neg_expanded_words_feat, neg_expanded_words_mask  # consumed only by external encoders
    neg_encoded_video_feat = projed_video_feat             # rec_fw=False + identity t2v_encoder
    _, _, neg_memory, neg_memory_global = transformer_standin(
        params["transformer"], neg_encoded_video_feat, video_mask,
        params["query_embed"], global_token)

    # positive + negative saliency in ONE pallas_call (grid = 2N)
    sal, neg_sal = saliency_scores_pair(
        memory, neg_memory, memory_global, neg_memory_global,
        params["saliency_proj1"], params["saliency_proj2"], hidden_dim)

    return {
        "pred_logits": outputs_class[-1],
        "pred_spans": outputs_coord[-1],
        "saliency_scores": sal,
        "neg_saliency_scores": neg_sal,
    }


# ----------------------------------------------------------------------------
# main
# ----------------------------------------------------------------------------

if __name__ == "__main__":
    key = jax.random.PRNGKey(0)
    N, Lv, Lw = 2, 16, 8
    txt_dim, vid_dim, hidden_dim = 32, 32, 32
    num_queries = 5

    kp, kv, kw = jax.random.split(key, 3)
    params = build_mesm_params(kp, txt_dim, vid_dim, hidden_dim, num_queries)

    video_feat = jax.random.normal(kv, (N, Lv, vid_dim), jnp.float32)
    video_mask = jnp.ones((N, Lv), bool).at[1, 12:].set(False)

    words_feat = jax.random.normal(kw, (N, Lw, txt_dim), jnp.float32)
    words_valid = jnp.ones((N, Lw), bool).at[0, 6:].set(False).at[1, 5:].set(False)
    words_feat = words_feat * words_valid[..., None].astype(jnp.float32)

    num_clips = jnp.array([1, 1], dtype=jnp.int32)

    out = mesm_forward(params, video_feat, video_mask, words_feat, num_clips)
    jax.block_until_ready(out)

    assert out["pred_logits"].shape == (N, num_queries, 2)
    assert out["pred_spans"].shape == (N, num_queries, 2)
    assert out["saliency_scores"].shape == (N, Lv)
    assert out["neg_saliency_scores"].shape == (N, Lv)
    for k, v in out.items():
        assert bool(jnp.all(jnp.isfinite(v))), f"non-finite values in {k}"
    print("KERNEL_OK")
</pallas_src>

<mosaic_0001>
module attributes {stable_mosaic.version = 11 : i64} {
  func.func @_proj2_kernel(%arg0: i32, %arg1: memref<32x32xf32, #tpu.memory_space<vmem>>, %arg2: memref<1x32xf32, #tpu.memory_space<vmem>>, %arg3: memref<1x32xf32, #tpu.memory_space<vmem>>, %arg4: memref<32x32xbf16, #tpu.memory_space<vmem>>, %arg5: memref<1x32xf32, #tpu.memory_space<vmem>>, %arg6: memref<1x32xf32, #tpu.memory_space<vmem>>, %arg7: memref<1x32xf32, #tpu.memory_space<vmem>>, %arg8: memref<32x32xbf16, #tpu.memory_space<vmem>>, %arg9: memref<1x32xf32, #tpu.memory_space<vmem>>, %arg10: memref<32x32xf32, #tpu.memory_space<vmem>>) attributes {dimension_semantics = [#tpu.dimension_semantics<parallel>], iteration_bounds = array<i64: 1>, scalar_prefetch = 0 : i64, scratch_operands = 0 : i64, tpu.core_type = #tpu.core_type<tc>, window_params = [{transform_indices = @transform_0, window_bounds = array<i64: 32, 32>}, {pipeline_mode = #tpu.pipeline_mode<synchronous>, transform_indices = @transform_1, window_bounds = array<i64: 1, 32>}, {pipeline_mode = #tpu.pipeline_mode<synchronous>, transform_indices = @transform_2, window_bounds = array<i64: 1, 32>}, {pipeline_mode = #tpu.pipeline_mode<synchronous>, transform_indices = @transform_3, window_bounds = array<i64: 32, 32>}, {pipeline_mode = #tpu.pipeline_mode<synchronous>, transform_indices = @transform_4, window_bounds = array<i64: 1, 32>}, {pipeline_mode = #tpu.pipeline_mode<synchronous>, transform_indices = @transform_5, window_bounds = array<i64: 1, 32>}, {pipeline_mode = #tpu.pipeline_mode<synchronous>, transform_indices = @transform_6, window_bounds = array<i64: 1, 32>}, {pipeline_mode = #tpu.pipeline_mode<synchronous>, transform_indices = @transform_7, window_bounds = array<i64: 32, 32>}, {pipeline_mode = #tpu.pipeline_mode<synchronous>, transform_indices = @transform_8, window_bounds = array<i64: 1, 32>}, {transform_indices = @transform_9, window_bounds = array<i64: 32, 32>}]} {
    %c0 = arith.constant 0 : index
    %c0_0 = arith.constant 0 : index
    %0 = vector.load %arg1[%c0, %c0_0] : memref<32x32xf32, #tpu.memory_space<vmem>>, vector<32x32xf32>
    %cst = arith.constant dense<0.000000e+00> : vector<32xf32>
    %1 = vector.multi_reduction <add>, %0, %cst [1] : vector<32x32xf32> to vector<32xf32>
    %2 = vector.shape_cast %1 : vector<32xf32> to vector<32x1xf32>
    %cst_1 = arith.constant 3.200000e+01 : f32
    %3 = vector.broadcast %cst_1 : f32 to vector<32x1xf32>
    %4 = arith.divf %2, %3 : vector<32x1xf32>
    %5 = vector.broadcast %4 : vector<32x1xf32> to vector<32x32xf32>
    %6 = arith.subf %0, %5 : vector<32x32xf32>
    %7 = arith.mulf %6, %6 : vector<32x32xf32>
    %cst_2 = arith.constant dense<0.000000e+00> : vector<32xf32>
    %8 = vector.multi_reduction <add>, %7, %cst_2 [1] : vector<32x32xf32> to vector<32xf32>
    %9 = vector.shape_cast %8 : vector<32xf32> to vector<32x1xf32>
    %cst_3 = arith.constant 3.200000e+01 : f32
    %10 = vector.broadcast %cst_3 : f32 to vector<32x1xf32>
    %11 = arith.divf %9, %10 : vector<32x1xf32>
    %12 = vector.broadcast %4 : vector<32x1xf32> to vector<32x32xf32>
    %13 = arith.subf %0, %12 : vector<32x32xf32>
    %cst_4 = arith.constant 9.99999974E-6 : f32
    %14 = vector.broadcast %cst_4 : f32 to vector<32x1xf32>
    %15 = arith.addf %11, %14 : vector<32x1xf32>
    %16 = math.rsqrt %15 : vector<32x1xf32>
    %17 = vector.broadcast %16 : vector<32x1xf32> to vector<32x32xf32>
    %18 = arith.mulf %13, %17 : vector<32x32xf32>
    %c0_5 = arith.constant 0 : index
    %c0_6 = arith.constant 0 : index
    %19 = vector.load %arg2[%c0_5, %c0_6] : memref<1x32xf32, #tpu.memory_space<vmem>>, vector<1x32xf32>
    %20 = vector.broadcast %19 : vector<1x32xf32> to vector<32x32xf32>
    %21 = arith.mulf %18, %20 : vector<32x32xf32>
    %c0_7 = arith.constant 0 : index
    %c0_8 = arith.constant 0 : index
    %22 = vector.load %arg3[%c0_7, %c0_8] : memref<1x32xf32, #tpu.memory_space<vmem>>, vector<1x32xf32>
    %23 = vector.broadcast %22 : vector<1x32xf32> to vector<32x32xf32>
    %24 = arith.addf %21, %23 : vector<32x32xf32>
    %25 = arith.truncf %24 : vector<32x32xf32> to vector<32x32xbf16>
    %c0_9 = arith.constant 0 : index
    %c0_10 = arith.constant 0 : index
    %26 = vector.load %arg4[%c0_9, %c0_10] : memref<32x32xbf16, #tpu.memory_space<vmem>>, vector<32x32xbf16>
    %cst_11 = arith.constant dense<0.000000e+00> : vector<32x32xf32>
    %27 = tpu.matmul %25, %26, %cst_11 {dimension_numbers = #tpu.dot_dimension_numbers<[1], [0], [0], [1], [0, 0, 1, 1], [], []>} : vector<32x32xbf16>, vector<32x32xbf16>, vector<32x32xf32> -> vector<32x32xf32>
    %c0_12 = arith.constant 0 : index
    %c0_13 = arith.constant 0 : index
    %28 = vector.load %arg5[%c0_12, %c0_13] : memref<1x32xf32, #tpu.memory_space<vmem>>, vector<1x32xf32>
    %29 = vector.broadcast %28 : vector<1x32xf32> to vector<32x32xf32>
    %30 = arith.addf %27, %29 : vector<32x32xf32>
    %cst_14 = arith.constant 0.000000e+00 : f32
    %31 = vector.broadcast %cst_14 : f32 to vector<32x32xf32>
    %32 = arith.maximumf %30, %31 : vector<32x32xf32>
    %cst_15 = arith.constant dense<0.000000e+00> : vector<32xf32>
    %33 = vector.multi_reduction <add>, %32, %cst_15 [1] : vector<32x32xf32> to vector<32xf32>
    %34 = vector.shape_cast %33 : vector<32xf32> to vector<32x1xf32>
    %cst_16 = arith.constant 3.200000e+01 : f32
    %35 = vector.broadcast %cst_16 : f32 to vector<32x1xf32>
    %36 = arith.divf %34, %35 : vector<32x1xf32>
    %37 = vector.broadcast %36 : vector<32x1xf32> to vector<32x32xf32>
    %38 = arith.subf %32, %37 : vector<32x32xf32>
    %39 = arith.mulf %38, %38 : vector<32x32xf32>
    %cst_17 = arith.constant dense<0.000000e+00> : vector<32xf32>
    %40 = vector.multi_reduction <add>, %39, %cst_17 [1] : vector<32x32xf32> to vector<32xf32>
    %41 = vector.shape_cast %40 : vector<32xf32> to vector<32x1xf32>
    %cst_18 = arith.constant 3.200000e+01 : f32
    %42 = vector.broadcast %cst_18 : f32 to vector<32x1xf32>
    %43 = arith.divf %41, %42 : vector<32x1xf32>
    %44 = vector.broadcast %36 : vector<32x1xf32> to vector<32x32xf32>
    %45 = arith.subf %32, %44 : vector<32x32xf32>
    %cst_19 = arith.constant 9.99999974E-6 : f32
    %46 = vector.broadcast %cst_19 : f32 to vector<32x1xf32>
    %47 = arith.addf %43, %46 : vector<32x1xf32>
    %48 = math.rsqrt %47 : vector<32x1xf32>
    %49 = vector.broadcast %48 : vector<32x1xf32> to vector<32x32xf32>
    %50 = arith.mulf %45, %49 : vector<32x32xf32>
    %c0_20 = arith.constant 0 : index
    %c0_21 = arith.constant 0 : index
    %51 = vector.load %arg6[%c0_20, %c0_21] : memref<1x32xf32, #tpu.memory_space<vmem>>, vector<1x32xf32>
    %52 = vector.broadcast %51 : vector<1x32xf32> to vector<32x32xf32>
    %53 = arith.mulf %50, %52 : vector<32x32xf32>
    %c0_22 = arith.constant 0 : index
    %c0_23 = arith.constant 0 : index
    %54 = vector.load %arg7[%c0_22, %c0_23] : memref<1x32xf32, #tpu.memory_space<vmem>>, vector<1x32xf32>
    %55 = vector.broadcast %54 : vector<1x32xf32> to vector<32x32xf32>
    %56 = arith.addf %53, %55 : vector<32x32xf32>
    %57 = arith.truncf %56 : vector<32x32xf32> to vector<32x32xbf16>
    %c0_24 = arith.constant 0 : index
    %c0_25 = arith.constant 0 : index
    %58 = vector.load %arg8[%c0_24, %c0_25] : memref<32x32xbf16, #tpu.memory_space<vmem>>, vector<32x32xbf16>
    %cst_26 = arith.constant dense<0.000000e+00> : vector<32x32xf32>
    %59 = tpu.matmul %57, %58, %cst_26 {dimension_numbers = #tpu.dot_dimension_numbers<[1], [0], [0], [1], [0, 0, 1, 1], [], []>} : vector<32x32xbf16>, vector<32x32xbf16>, vector<32x32xf32> -> vector<32x32xf32>
    %c0_27 = arith.constant 0 : index
    %c0_28 = arith.constant 0 : index
    %60 = vector.load %arg9[%c0_27, %c0_28] : memref<1x32xf32, #tpu.memory_space<vmem>>, vector<1x32xf32>
    %61 = vector.broadcast %60 : vector<1x32xf32> to vector<32x32xf32>
    %62 = arith.addf %59, %61 : vector<32x32xf32>
    %c0_29 = arith.constant 0 : index
    %c0_30 = arith.constant 0 : index
    %63 = vector.load %arg10[%c0_29, %c0_30] : memref<32x32xf32, #tpu.memory_space<vmem>>, vector<32x32xf32>
    tpu.vector_store %arg10[%c0_29, %c0_30], %62 {strides = array<i32>} : memref<32x32xf32, #tpu.memory_space<vmem>>, vector<32x32xf32>,
    return
  }
  func.func @transform_0(%arg0: i32) -> (i32, i32) {
    %c0_i32 = arith.constant 0 : i32
    %c0_i32_0 = arith.constant 0 : i32
    return %arg0, %c0_i32 : i32, i32
  }
  func.func @transform_1(%arg0: i32) -> (i32, i32) {
    %c0_i32 = arith.constant 0 : i32
    %c0_i32_0 = arith.constant 0 : i32
    %c0_i32_1 = arith.constant 0 : i32
    return %c0_i32, %c0_i32_0 : i32, i32
  }
  func.func @transform_2(%arg0: i32) -> (i32, i32) {
    %c0_i32 = arith.constant 0 : i32
    %c0_i32_0 = arith.constant 0 : i32
    %c0_i32_1 = arith.constant 0 : i32
    return %c0_i32, %c0_i32_0 : i32, i32
  }
  func.func @transform_3(%arg0: i32) -> (i32, i32) {
    %c0_i32 = arith.constant 0 : i32
    %c0_i32_0 = arith.constant 0 : i32
    %c0_i32_1 = arith.constant 0 : i32
    return %c0_i32, %c0_i32_0 : i32, i32
  }
  func.func @transform_4(%arg0: i32) -> (i32, i32) {
    %c0_i32 = arith.constant 0 : i32
    %c0_i32_0 = arith.constant 0 : i32
    %c0_i32_1 = arith.constant 0 : i32
    return %c0_i32, %c0_i32_0 : i32, i32
  }
  func.func @transform_5(%arg0: i32) -> (i32, i32) {
    %c0_i32 = arith.constant 0 : i32
    %c0_i32_0 = arith.constant 0 : i32
    %c0_i32_1 = arith.constant 0 : i32
    return %c0_i32, %c0_i32_0 : i32, i32
  }
  func.func @transform_6(%arg0: i32) -> (i32, i32) {
    %c0_i32 = arith.constant 0 : i32
    %c0_i32_0 = arith.constant 0 : i32
    %c0_i32_1 = arith.constant 0 : i32
    return %c0_i32, %c0_i32_0 : i32, i32
  }
  func.func @transform_7(%arg0: i32) -> (i32, i32) {
    %c0_i32 = arith.constant 0 : i32
    %c0_i32_0 = arith.constant 0 : i32
    %c0_i32_1 = arith.constant 0 : i32
    return %c0_i32, %c0_i32_0 : i32, i32
  }
  func.func @transform_8(%arg0: i32) -> (i32, i32) {
    %c0_i32 = arith.constant 0 : i32
    %c0_i32_0 = arith.constant 0 : i32
    %c0_i32_1 = arith.constant 0 : i32
    return %c0_i32, %c0_i32_0 : i32, i32
  }
  func.func @transform_9(%arg0: i32) -> (i32, i32) {
    %c0_i32 = arith.constant 0 : i32
    %c0_i32_0 = arith.constant 0 : i32
    return %arg0, %c0_i32 : i32, i32
  }
}

</mosaic_0001>

<llo_original>
// kernel: tpu_custom_call.1
$region0: #{tpu_custom_call.1}
  #allocation0 [shape = 'u32[]', space=smem, size = 0x4, offset = 0x4, fixed_abs, tag = 'smem constant byte address 0x4 - core index']
  #allocation1 [shape = 'u32[144,128]{1,0:T(1,128)}', space=vmem, size = 0x12000, scoped, tag = 'internal scratch']
  %s0 = inlined_call_operand.hbm [shape: f32[32,32], index: 0, kind: input, shape index: {}]
  %s1 = inlined_call_operand.vmem [shape: f32[1,32], index: 1, kind: input, shape index: {}]
  %s2 = inlined_call_operand.vmem [shape: f32[1,32], index: 2, kind: input, shape index: {}]
  %s3 = inlined_call_operand.hbm [shape: bf16[32,32], index: 3, kind: input, shape index: {}]
  %s4 = inlined_call_operand.vmem [shape: f32[1,32], index: 4, kind: input, shape index: {}]
  %s5 = inlined_call_operand.vmem [shape: f32[1,32], index: 5, kind: input, shape index: {}]
  %s6 = inlined_call_operand.vmem [shape: f32[1,32], index: 6, kind: input, shape index: {}]
  %s7 = inlined_call_operand.vmem [shape: bf16[32,32], index: 7, kind: input, shape index: {}]
  %s8 = inlined_call_operand.vmem [shape: f32[1,32], index: 8, kind: input, shape index: {}]
  %s9 = inlined_call_operand.hbm [shape: f32[32,32], index: 9, kind: output, shape index: {}]
  %s10 = sld [smem:[#allocation0]]
  $region54: #{tpu_custom_call.1} parent=0
    _
  %s12 = ssub.s32 1, %s10
  %s13 = scalar_select 0, %s12, %s10
  $region1: #{tpu_custom_call.1} parent=0
    #allocation2 [shape = 'u8[16384]{0}', space=vmem, size = 0x4000, scoped, tag = 'input window, operand 0, single buffered']
    #allocation3 [shape = 's32[1]{0}', space=sflag, size = 0x4, scoped, tag = 'scoped memory for tpu_custom_call.1']
    #allocation4 [shape = 's32[1]{0}', space=sflag, size = 0x4, scoped, tag = 'scoped memory for tpu_custom_call.1']
    #allocation5 [shape = 'u8[8192]{0}', space=vmem, size = 0x2000, scoped, tag = 'input window, operand 3, single buffered']
    #allocation6 [shape = 's32[1]{0}', space=sflag, size = 0x4, scoped, tag = 'scoped memory for tpu_custom_call.1']
    #allocation7 [shape = 'u8[16384]{0}', space=vmem, size = 0x4000, scoped, tag = 'output window, operand 0, single buffered']
    %14 = vsyncpa [#allocation3], 0
    %15 = vsyncpa [#allocation6], 0
    %16 = vsyncpa [#allocation4], 0
    // Predicated region
    $region2: #{tpu_custom_call.1} parent=1 // pred_check
      _
    $region3: #{tpu_custom_call.1} parent=1 // pred_check_branch
      %18 = sbr.rel (0) target = $region5
    $region4: #{tpu_custom_call.1} parent=1 // pred_region
      %s20 = ssub.s32 512, 512
      %21 = vsyncadd [#allocation3], %s20
      %s22 = sshll.u32 [#allocation2], 4
      %s23 = int_to_ptr.vmem [resolvable:$true] %s22
      %28 = dma.hbm_to_vmem [thread:$0]  %s0, 512, %s23, [#allocation3], 128, 128, 8
    $region5: #{tpu_custom_call.1} parent=1 // pred_fallthru
      _
    // Predicated region
    $region6: #{tpu_custom_call.1} parent=1 // pred_check
      _
    $region7: #{tpu_custom_call.1} parent=1 // pred_check_branch
      %30 = sbr.rel (0) target = $region9
    $region8: #{tpu_custom_call.1} parent=1 // pred_region
      _
    $region9: #{tpu_custom_call.1} parent=1 // pred_fallthru
      _
    // Predicated region
    $region10: #{tpu_custom_call.1} parent=1 // pred_check
      _
    $region11: #{tpu_custom_call.1} parent=1 // pred_check_branch
      %32 = sbr.rel (0) target = $region13
    $region12: #{tpu_custom_call.1} parent=1 // pred_region
      _
    $region13: #{tpu_custom_call.1} parent=1 // pred_fallthru
      _
    // Predicated region
    $region14: #{tpu_custom_call.1} parent=1 // pred_check
      _
    $region15: #{tpu_custom_call.1} parent=1 // pred_check_branch
      %34 = sbr.rel (0) target = $region17
    $region16: #{tpu_custom_call.1} parent=1 // pred_region
      %s36 = ssub.s32 256, 256
      %37 = vsyncadd [#allocation6], %s36
      %s38 = sshll.u32 [#allocation5], 4
      %s39 = int_to_ptr.vmem [resolvable:$true] %s38
      %44 = dma.hbm_to_vmem [thread:$0]  %s3, 256, %s39, [#allocation6], 64, 64, 4
    $region17: #{tpu_custom_call.1} parent=1 // pred_fallthru
      _
    // Predicated region
    $region18: #{tpu_custom_call.1} parent=1 // pred_check
      _
    $region19: #{tpu_custom_call.1} parent=1 // pred_check_branch
      %46 = sbr.rel (0) target = $region21
    $region20: #{tpu_custom_call.1} parent=1 // pred_region
      _
    $region21: #{tpu_custom_call.1} parent=1 // pred_fallthru
      _
    // Predicated region
    $region22: #{tpu_custom_call.1} parent=1 // pred_check
      _
    $region23: #{tpu_custom_call.1} parent=1 // pred_check_branch
      %48 = sbr.rel (0) target = $region25
    $region24: #{tpu_custom_call.1} parent=1 // pred_region
      _
    $region25: #{tpu_custom_call.1} parent=1 // pred_fallthru
      _
    // Predicated region
    $region26: #{tpu_custom_call.1} parent=1 // pred_check
      _
    $region27: #{tpu_custom_call.1} parent=1 // pred_check_branch
      %50 = sbr.rel (0) target = $region29
    $region28: #{tpu_custom_call.1} parent=1 // pred_region
      _
    $region29: #{tpu_custom_call.1} parent=1 // pred_fallthru
      _
    // Predicated region
    $region30: #{tpu_custom_call.1} parent=1 // pred_check
      _
    $region31: #{tpu_custom_call.1} parent=1 // pred_check_branch
      %52 = sbr.rel (0) target = $region33
    $region32: #{tpu_custom_call.1} parent=1 // pred_region
      _
    $region33: #{tpu_custom_call.1} parent=1 // pred_fallthru
      _
    // Predicated region
    $region34: #{tpu_custom_call.1} parent=1 // pred_check
      _
    $region35: #{tpu_custom_call.1} parent=1 // pred_check_branch
      %54 = sbr.rel (0) target = $region37
    $region36: #{tpu_custom_call.1} parent=1 // pred_region
      _
    $region37: #{tpu_custom_call.1} parent=1 // pred_fallthru
      _
    // Predicated region
    $region38: #{tpu_custom_call.1} parent=1 // pred_check
      _
    $region39: #{tpu_custom_call.1} parent=1 // pred_check_branch
      %56 = sbr.rel (0) target = $region41
    $region40: #{tpu_custom_call.1} parent=1 // pred_region
      %57 = dma.done [#allocation3], 512
    $region41: #{tpu_custom_call.1} parent=1 // pred_fallthru
      _
    // Predicated region
    $region42: #{tpu_custom_call.1} parent=1 // pred_check
      _
    $region43: #{tpu_custom_call.1} parent=1 // pred_check_branch
      %59 = sbr.rel (0) target = $region45
    $region44: #{tpu_custom_call.1} parent=1 // pred_region
      %60 = dma.done [#allocation6], 256
    $region45: #{tpu_custom_call.1} parent=1 // pred_fallthru
      _
    %v62 = vld [vmem:[#allocation2] sm:$0xff]
    %v63 = vld [vmem:[#allocation2 + $0x8] sm:$0xff]
    %v64 = vld [vmem:[#allocation2 + $0x10] sm:$0xff]
    %v65 = vld [vmem:[#allocation2 + $0x18] sm:$0xff]
    %vm66 = vcmask 261120
    %v67 = vsel %vm66, %v62, 0.0
    %68 = vadd.xlane.f32.xlu0 %v67
    %v69 = vpop.xlane.xlu0 %68
    %v70 = vsel %vm66, %v63, 0.0
    %71 = vadd.xlane.f32.xlu0 %v70
    %v72 = vpop.xlane.xlu0 %71
    %v73 = vsel %vm66, %v64, 0.0
    %74 = vadd.xlane.f32.xlu0 %v73
    %v75 = vpop.xlane.xlu0 %74
    %v76 = vsel %vm66, %v65, 0.0
    %77 = vadd.xlane.f32.xlu0 %v76
    %v78 = vpop.xlane.xlu0 %77
    %v79 = vrcp.pop 32.0
    %v80 = vmul.f32 %v69, %v79
    %v81 = vmul.f32 %v72, %v79
    %v82 = vmul.f32 %v75, %v79
    %v83 = vmul.f32 %v78, %v79
    %v84 = vsub.f32 %v62, %v80
    %v85 = vsub.f32 %v63, %v81
    %v86 = vsub.f32 %v64, %v82
    %v87 = vsub.f32 %v65, %v83
    %v88 = vmul.f32 %v84, %v84
    %v89 = vmul.f32 %v85, %v85
    %v90 = vmul.f32 %v86, %v86
    %v91 = vmul.f32 %v87, %v87
    %v92 = vsel %vm66, %v88, 0.0
    %93 = vadd.xlane.f32.xlu0 %v92
    %v94 = vpop.xlane.xlu0 %93
    %v95 = vsel %vm66, %v89, 0.0
    %96 = vadd.xlane.f32.xlu0 %v95
    %v97 = vpop.xlane.xlu0 %96
    %v98 = vsel %vm66, %v90, 0.0
    %99 = vadd.xlane.f32.xlu0 %v98
    %v100 = vpop.xlane.xlu0 %99
    %v101 = vsel %vm66, %v91, 0.0
    %102 = vadd.xlane.f32.xlu0 %v101
    %v103 = vpop.xlane.xlu0 %102
    %v104 = vmul.f32 %v94, %v79
    %v105 = vmul.f32 %v97, %v79
    %v106 = vmul.f32 %v100, %v79
    %v107 = vmul.f32 %v103, %v79
    %v108 = vadd.f32 %v104, 1e-05
    %v109 = vadd.f32 %v105, 1e-05
    %v110 = vadd.f32 %v106, 1e-05
    %v111 = vadd.f32 %v107, 1e-05
    %v112 = vrsqrt.pop %v108
    %v113 = vrsqrt.pop %v109
    %v114 = vrsqrt.pop %v110
    %v115 = vrsqrt.pop %v111
    %v116 = vmul.f32 %v84, %v112
    %v117 = vmul.f32 %v85, %v113
    %v118 = vmul.f32 %v86, %v114
    %v119 = vmul.f32 %v87, %v115
    %v120 = vld [vmem:[%s1] sm:$0x1]
    %v122 = vlaneseq
    %v123 = vshrl.u32 %v122, 7
    %v124 = vsub.s32 0, %v123
    %v125 = vrot.slane %v120, %v124
    %v127 = vmul.f32 %v116, %v125
    %v128 = vmul.f32 %v117, %v125
    %v129 = vmul.f32 %v118, %v125
    %v130 = vmul.f32 %v119, %v125
    %v131 = vld [vmem:[%s2] sm:$0x1]
    %v133 = vlaneseq
    %v134 = vshrl.u32 %v133, 7
    %v135 = vsub.s32 0, %v134
    %v136 = vrot.slane %v131, %v135
    %v138 = vadd.f32 %v127, %v136
    %v139 = vadd.f32 %v128, %v136
    %v140 = vadd.f32 %v129, %v136
    %v141 = vadd.f32 %v130, %v136
    %v142 = vpack.c.bf16 %v139, %v138
    %v143 = vpack.c.bf16 %v141, %v140
    %v144 = vld [vmem:[#allocation5] sm:$0xf]
    %v145 = vld [vmem:[#allocation5 + $0x4] sm:$0xf]
    %v146 = vld [vmem:[#allocation5 + $0x8] sm:$0xf]
    %v147 = vld [vmem:[#allocation5 + $0xc] sm:$0xf]
    %v148 = vld [vmem:[%s4] sm:$0x1]
    %v150 = vlaneseq
    %v151 = vshrl.u32 %v150, 7
    %v152 = vsub.s32 0, %v151
    %v153 = vrot.slane %v148, %v152
    %v159 = vunpack.c.l.b16 %v144
    %v160 = vunpack.c.l.b16 %v145
    %v161 = vunpack.c.l.b16 %v146
    %v162 = vunpack.c.l.b16 %v147
    %v163 = vpack.c.b16 %v160, %v159
    %v164 = vpack.c.b16 %v162, %v161
    %v168 = vsel %vm66, %v142, 0
    %v171 = vsel %vm66, %v143, 0
    %173 = vmatprep.subr.bf16.mxu0 0
    %174 = vmatpush1.bf16.msra.mxu0 %v163
    %175 = vmatprep.subr.bf16.mxu0 0
    %176 = vmatpush1.bf16.msra.mxu0 %v164
    %177 = vmatprep.subr.bf16.mxu0 0
    %178 = vmatpush1.bf16.msra.mxu0 0
    %179 = vmatprep.subr.bf16.mxu0 0
    %180 = vmatpush1.bf16.msra.mxu0 0
    %181 = vmatprep.subr.bf16.mxu0 0
    %182 = vmatpush1.bf16.msra.mxu0 0
    %183 = vmatprep.subr.bf16.mxu0 0
    %184 = vmatpush1.bf16.msra.mxu0 0
    %185 = vmatprep.subr.bf16.mxu0 0
    %186 = vmatpush1.bf16.msra.mxu0 0
    %187 = vmatprep.subr.bf16.mxu0 0
    %188 = vmatpush1.bf16.msra.mxu0 0
    %189 = vmatprep.subr.bf16.mxu0 0
    %190 = vmatpush1.bf16.msra.mxu0 0
    %191 = vmatprep.subr.bf16.mxu0 0
    %192 = vmatpush1.bf16.msra.mxu0 0
    %193 = vmatprep.subr.bf16.mxu0 0
    %194 = vmatpush1.bf16.msra.mxu0 0
    %195 = vmatprep.subr.bf16.mxu0 0
    %196 = vmatpush1.bf16.msra.mxu0 0
    %197 = vmatprep.subr.bf16.mxu0 0
    %198 = vmatpush1.bf16.msra.mxu0 0
    %199 = vmatprep.subr.bf16.mxu0 0
    %200 = vmatpush1.bf16.msra.mxu0 0
    %201 = vmatprep.subr.bf16.mxu0 0
    %202 = vmatpush1.bf16.msra.mxu0 0
    %203 = vmatprep.subr.bf16.mxu0 0
    %204 = vmatpush1.bf16.msra.mxu0 0
    %205 = vmatprep.mubr.bf16.mxu0 0
    %206 = vmatmul.mubr.bf16.gmra.mrb[0].mxu0 %v168
    %v207 = vpop.f32.mrb[0].mxu0
    %v208 = vadd.f32 %v153, %v207
    %v209 = vpop.f32.mrb[0].mxu0
    %v210 = vpop.f32.mrb[0].mxu0
    %v211 = vadd.f32 %v153, %v210
    %v212 = vpop.f32.mrb[0].mxu0
    %213 = vmatprep.mubr.bf16.mxu0 0
    %214 = vmatmul.mubr.bf16.gmra.mrb[0].mxu0 %v171
    %v215 = vpop.f32.mrb[0].mxu0
    %v216 = vadd.f32 %v153, %v215
    %v217 = vpop.f32.mrb[0].mxu0
    %v218 = vpop.f32.mrb[0].mxu0
    %v219 = vadd.f32 %v153, %v218
    %v220 = vpop.f32.mrb[0].mxu0
    %221 = vdwg.mxu0
    %v222 = vmax.f32 %v208, 0.0
    %v223 = vmax.f32 %v211, 0.0
    %v224 = vmax.f32 %v216, 0.0
    %v225 = vmax.f32 %v219, 0.0
    %v226 = vsel %vm66, %v222, 0.0
    %227 = vadd.xlane.f32.xlu0 %v226
    %v228 = vpop.xlane.xlu0 %227
    %v229 = vsel %vm66, %v223, 0.0
    %230 = vadd.xlane.f32.xlu0 %v229
    %v231 = vpop.xlane.xlu0 %230
    %v232 = vsel %vm66, %v224, 0.0
    %233 = vadd.xlane.f32.xlu0 %v232
    %v234 = vpop.xlane.xlu0 %233
    %v235 = vsel %vm66, %v225, 0.0
    %236 = vadd.xlane.f32.xlu0 %v235
    %v237 = vpop.xlane.xlu0 %236
    %v238 = vmul.f32 %v228, %v79
    %v239 = vmul.f32 %v231, %v79
    %v240 = vmul.f32 %v234, %v79
    %v241 = vmul.f32 %v237, %v79
    %v242 = vsub.f32 %v222, %v238
    %v243 = vsub.f32 %v223, %v239
    %v244 = vsub.f32 %v224, %v240
    %v245 = vsub.f32 %v225, %v241
    %v246 = vmul.f32 %v242, %v242
    %v247 = vmul.f32 %v243, %v243
    %v248 = vmul.f32 %v244, %v244
    %v249 = vmul.f32 %v245, %v245
    %v250 = vsel %vm66, %v246, 0.0
    %251 = vadd.xlane.f32.xlu0 %v250
    %v252 = vpop.xlane.xlu0 %251
    %v253 = vsel %vm66, %v247, 0.0
    %254 = vadd.xlane.f32.xlu0 %v253
    %v255 = vpop.xlane.xlu0 %254
    %v256 = vsel %vm66, %v248, 0.0
    %257 = vadd.xlane.f32.xlu0 %v256
    %v258 = vpop.xlane.xlu0 %257
    %v259 = vsel %vm66, %v249, 0.0
    %260 = vadd.xlane.f32.xlu0 %v259
    %v261 = vpop.xlane.xlu0 %260
    %v262 = vmul.f32 %v252, %v79
    %v263 = vmul.f32 %v255, %v79
    %v264 = vmul.f32 %v258, %v79
    %v265 = vmul.f32 %v261, %v79
    %v266 = vadd.f32 %v262, 1e-05
    %v267 = vadd.f32 %v263, 1e-05
    %v268 = vadd.f32 %v264, 1e-05
    %v269 = vadd.f32 %v265, 1e-05
    %v270 = vrsqrt.pop %v266
    %v271 = vrsqrt.pop %v267
    %v272 = vrsqrt.pop %v268
    %v273 = vrsqrt.pop %v269
    %v274 = vmul.f32 %v242, %v270
    %v275 = vmul.f32 %v243, %v271
    %v276 = vmul.f32 %v244, %v272
    %v277 = vmul.f32 %v245, %v273
    %v278 = vld [vmem:[%s5] sm:$0x1]
    %v280 = vlaneseq
    %v281 = vshrl.u32 %v280, 7
    %v282 = vsub.s32 0, %v281
    %v283 = vrot.slane %v278, %v282
    %v285 = vmul.f32 %v274, %v283
    %v286 = vmul.f32 %v275, %v283
    %v287 = vmul.f32 %v276, %v283
    %v288 = vmul.f32 %v277, %v283
    %v289 = vld [vmem:[%s6] sm:$0x1]
    %v291 = vlaneseq
    %v292 = vshrl.u32 %v291, 7
    %v293 = vsub.s32 0, %v292
    %v294 = vrot.slane %v289, %v293
    %v296 = vadd.f32 %v285, %v294
    %v297 = vadd.f32 %v286, %v294
    %v298 = vadd.f32 %v287, %v294
    %v299 = vadd.f32 %v288, %v294
    %v300 = vpack.c.bf16 %v297, %v296
    %v301 = vpack.c.bf16 %v299, %v298
    %v302 = vld [vmem:[%s7] sm:$0xf]
    %v303 = vld [vmem:[%s7 + $0x4] sm:$0xf]
    %v304 = vld [vmem:[%s7 + $0x8] sm:$0xf]
    %v305 = vld [vmem:[%s7 + $0xc] sm:$0xf]
    %v306 = vld [vmem:[%s8] sm:$0x1]
    %v308 = vlaneseq
    %v309 = vshrl.u32 %v308, 7
    %v310 = vsub.s32 0, %v309
    %v311 = vrot.slane %v306, %v310
    %v317 = vunpack.c.l.b16 %v302
    %v318 = vunpack.c.l.b16 %v303
    %v319 = vunpack.c.l.b16 %v304
    %v320 = vunpack.c.l.b16 %v305
    %v321 = vpack.c.b16 %v318, %v317
    %v322 = vpack.c.b16 %v320, %v319
    %v326 = vsel %vm66, %v300, 0
    %v329 = vsel %vm66, %v301, 0
    %331 = vmatprep.subr.bf16.mxu0 0
    %332 = vmatpush1.bf16.msra.mxu0 %v321
    %333 = vmatprep.subr.bf16.mxu0 0
    %334 = vmatpush1.bf16.msra.mxu0 %v322
    %335 = vmatprep.subr.bf16.mxu0 0
    %336 = vmatpush1.bf16.msra.mxu0 0
    %337 = vmatprep.subr.bf16.mxu0 0
    %338 = vmatpush1.bf16.msra.mxu0 0
    %339 = vmatprep.subr.bf16.mxu0 0
    %340 = vmatpush1.bf16.msra.mxu0 0
    %341 = vmatprep.subr.bf16.mxu0 0
    %342 = vmatpush1.bf16.msra.mxu0 0
    %343 = vmatprep.subr.bf16.mxu0 0
    %344 = vmatpush1.bf16.msra.mxu0 0
    %345 = vmatprep.subr.bf16.mxu0 0
    %346 = vmatpush1.bf16.msra.mxu0 0
    %347 = vmatprep.subr.bf16.mxu0 0
    %348 = vmatpush1.bf16.msra.mxu0 0
    %349 = vmatprep.subr.bf16.mxu0 0
    %350 = vmatpush1.bf16.msra.mxu0 0
    %351 = vmatprep.subr.bf16.mxu0 0
    %352 = vmatpush1.bf16.msra.mxu0 0
    %353 = vmatprep.subr.bf16.mxu0 0
    %354 = vmatpush1.bf16.msra.mxu0 0
    %355 = vmatprep.subr.bf16.mxu0 0
    %356 = vmatpush1.bf16.msra.mxu0 0
    %357 = vmatprep.subr.bf16.mxu0 0
    %358 = vmatpush1.bf16.msra.mxu0 0
    %359 = vmatprep.subr.bf16.mxu0 0
    %360 = vmatpush1.bf16.msra.mxu0 0
    %361 = vmatprep.subr.bf16.mxu0 0
    %362 = vmatpush1.bf16.msra.mxu0 0
    %363 = vmatprep.mubr.bf16.mxu0 0
    %364 = vmatmul.mubr.bf16.gmra.mrb[0].mxu0 %v326
    %v365 = vpop.f32.mrb[0].mxu0
    %v366 = vadd.f32 %v311, %v365
    %v367 = vpop.f32.mrb[0].mxu0
    %v368 = vpop.f32.mrb[0].mxu0
    %v369 = vadd.f32 %v311, %v368
    %v370 = vpop.f32.mrb[0].mxu0
    %371 = vmatprep.mubr.bf16.mxu0 0
    %372 = vmatmul.mubr.bf16.gmra.mrb[0].mxu0 %v329
    %v373 = vpop.f32.mrb[0].mxu0
    %v374 = vadd.f32 %v311, %v373
    %v375 = vpop.f32.mrb[0].mxu0
    %v376 = vpop.f32.mrb[0].mxu0
    %v377 = vadd.f32 %v311, %v376
    %v378 = vpop.f32.mrb[0].mxu0
    %379 = vdwg.mxu0
    %380 = vst.msk [vmem:[#allocation7] sm:$0xff] %vm66, %v366
    %381 = vst.msk [vmem:[#allocation7 + $0x8] sm:$0xff] %vm66, %v369
    %382 = vst.msk [vmem:[#allocation7 + $0x10] sm:$0xff] %vm66, %v374
    %383 = vst.msk [vmem:[#allocation7 + $0x18] sm:$0xff] %vm66, %v377
    // Predicated region
    $region46: #{tpu_custom_call.1} parent=1 // pred_check
      _
    $region47: #{tpu_custom_call.1} parent=1 // pred_check_branch
      %385 = sbr.rel (0) target = $region49
    $region48: #{tpu_custom_call.1} parent=1 // pred_region
      %s387 = ssub.s32 512, 512
      %388 = vsyncadd [#allocation4], %s387
      %s389 = sshll.u32 [#allocation7], 4
      %s390 = int_to_ptr.vmem [resolvable:$true] %s389
      %395 = dma.vmem_to_hbm [thread:$0]  %s390, 512, %s9, [#allocation4], 128, 128, 8
    $region49: #{tpu_custom_call.1} parent=1 // pred_fallthru
      _
    // Predicated region
    $region50: #{tpu_custom_call.1} parent=1 // pred_check
      _
    $region51: #{tpu_custom_call.1} parent=1 // pred_check_branch
      %397 = sbr.rel (0) target = $region53
    $region52: #{tpu_custom_call.1} parent=1 // pred_region
      %398 = dma.done [#allocation4], 512
    $region53: #{tpu_custom_call.1} parent=1 // pred_fallthru
      _
    %399 = vsyncpa [#allocation3], 1
    %400 = vsyncpa [#allocation6], 1
    %401 = vsyncpa [#allocation4], 1

</llo_original>
